<compile_context>
chip_gen: v7x
topology: tpu7x:2x2x1
jax: 0.10.0
libtpu: 0.0.40
codegen_flags: <defaults>
</compile_context>

<pallas_src>
import jax
import jax.numpy as jnp
from jax.experimental import pallas as pl
from jax.experimental.pallas import tpu as pltpu


def _iou_kernel(pred_ref, target_ref, iou_ref, inter_acc, sum_acc):
    """One (row_block, spatial_block) grid step."""
    k = pl.program_id(1)

    @pl.when(k == 0)
    def _():
        inter_acc[...] = jnp.zeros_like(inter_acc)
        sum_acc[...] = jnp.zeros_like(sum_acc)

    # Hot path: sigmoid + elementwise products/sums + lane-axis reductions.
    p = jax.nn.sigmoid(pred_ref[...].astype(jnp.float32))
    t = target_ref[...].astype(jnp.float32)

    inter_acc[...] += jnp.sum(p * t, axis=1, keepdims=True)   # (rb, 1)
    sum_acc[...] += jnp.sum(p + t, axis=1, keepdims=True)     # (rb, 1)

    @pl.when(k == pl.num_programs(1) - 1)
    def _():
        inter = inter_acc[...]
        union = sum_acc[...] - inter
        iou_ref[...] = 1.0 - inter / union


def _round_up(x, m):
    return (x + m - 1) // m * m


_MAX_ROW_TILE = 256        # sublanes per row block
_MAX_SPATIAL_TILE = 2048   # lanes per spatial block (multiple of 128)


def iou_loss(pred, target):
    """Pallas implementation of IOU.forward(pred, target) -> scalar f32."""
    assert pred.shape == target.shape
    B, C, H, W = pred.shape
    BC, HW = B * C, H * W

    pred2d = pred.reshape(BC, HW)
    target2d = target.reshape(BC, HW)

    # ---- tile selection ----
    rb = min(_MAX_ROW_TILE, _round_up(BC, 8))
    bc_pad = _round_up(BC, rb)

    if HW <= _MAX_SPATIAL_TILE:
        hw_tile = HW          # full-extent block: legal even if not %128
        hw_pad = HW
    else:
        hw_tile = _MAX_SPATIAL_TILE
        hw_pad = _round_up(HW, hw_tile)

    # ---- padding ----
    # Spatial padding: pred -> very negative (sigmoid == 0), target -> 0,
    # so padded columns contribute nothing to inter or union.
    if hw_pad != HW:
        pred2d = jnp.pad(pred2d, ((0, 0), (0, hw_pad - HW)),
                         constant_values=-1e9)
        target2d = jnp.pad(target2d, ((0, 0), (0, hw_pad - HW)))
    # Row padding: padded rows produce a finite dummy IoU, sliced off below.
    if bc_pad != BC:
        pred2d = jnp.pad(pred2d, ((0, bc_pad - BC), (0, 0)))
        target2d = jnp.pad(target2d, ((0, bc_pad - BC), (0, 0)))

    grid = (bc_pad // rb, hw_pad // hw_tile)

    iou_rows = pl.pallas_call(
        _iou_kernel,
        out_shape=jax.ShapeDtypeStruct((bc_pad, 1), jnp.float32),
        grid_spec=pltpu.PrefetchScalarGridSpec(
            num_scalar_prefetch=0,
            grid=grid,
            in_specs=[
                pl.BlockSpec((rb, hw_tile), lambda i, k: (i, k)),
                pl.BlockSpec((rb, hw_tile), lambda i, k: (i, k)),
            ],
            out_specs=pl.BlockSpec((rb, 1), lambda i, k: (i, 0)),
            scratch_shapes=[
                pltpu.VMEM((rb, 1), jnp.float32),
                pltpu.VMEM((rb, 1), jnp.float32),
            ],
        ),
        compiler_params=pltpu.CompilerParams(
            dimension_semantics=("parallel", "arbitrary"),
            vmem_limit_bytes=32 * 1024 * 1024,
        ),
    )(pred2d, target2d)

    # Final mean over the real (un-padded) rows.
    return jnp.mean(iou_rows[:BC, 0])


def _iou_reference(pred, target):
    p = jax.nn.sigmoid(pred.astype(jnp.float32))
    t = target.astype(jnp.float32)
    inter = (p * t).sum(axis=(2, 3))
    union = (p + t).sum(axis=(2, 3)) - inter
    return jnp.mean(1.0 - inter / union)


if __name__ == "__main__":
    key = jax.random.PRNGKey(0)
    k1, k2, k3, k4 = jax.random.split(key, 4)

    # Primary (small) case matching the module's expected NCHW input.
    B, C, H, W = 2, 4, 16, 16
    pred = jax.random.normal(k1, (B, C, H, W), dtype=jnp.float32)
    target = jax.random.uniform(k2, (B, C, H, W), dtype=jnp.float32)

    out = jax.block_until_ready(iou_loss(pred, target))
    ref = jax.block_until_ready(_iou_reference(pred, target))
    assert jnp.allclose(out, ref, atol=1e-5, rtol=1e-5), (out, ref)

    # Ragged case exercising row padding, spatial tiling and spatial padding.
    B2, C2, H2, W2 = 2, 3, 48, 50   # BC=6 (pad to 8), HW=2400 (tile 2048, pad to 4096)
    pred2 = jax.random.normal(k3, (B2, C2, H2, W2), dtype=jnp.float32)
    target2 = jax.random.uniform(k4, (B2, C2, H2, W2), dtype=jnp.float32)

    out2 = jax.block_until_ready(iou_loss(pred2, target2))
    ref2 = jax.block_until_ready(_iou_reference(pred2, target2))
    assert jnp.allclose(out2, ref2, atol=1e-5, rtol=1e-5), (out2, ref2)

    print("KERNEL_OK")
</pallas_src>

<mosaic_0001>
module attributes {stable_mosaic.version = 11 : i64} {
  func.func @_iou_kernel(%arg0: i32, %arg1: i32, %arg2: memref<8x256xf32, #tpu.memory_space<vmem>>, %arg3: memref<8x256xf32, #tpu.memory_space<vmem>>, %arg4: memref<8x1xf32, #tpu.memory_space<vmem>>, %arg5: memref<8x1xf32, #tpu.memory_space<vmem>>, %arg6: memref<8x1xf32, #tpu.memory_space<vmem>>) attributes {dimension_semantics = [#tpu.dimension_semantics<parallel>, #tpu.dimension_semantics<arbitrary>], iteration_bounds = array<i64: 1, 1>, scalar_prefetch = 0 : i64, scratch_operands = 2 : i64, tpu.core_type = #tpu.core_type<tc>, window_params = [{transform_indices = @transform_0, window_bounds = array<i64: 8, 256>}, {transform_indices = @transform_1, window_bounds = array<i64: 8, 256>}, {transform_indices = @transform_2, window_bounds = array<i64: 8, 1>}]} {
    %c0_i32 = arith.constant 0 : i32
    %0 = arith.cmpi eq, %arg1, %c0_i32 : i32
    %1 = arith.extui %0 : i1 to i32
    %c0_i32_0 = arith.constant 0 : i32
    %2 = arith.cmpi ne, %1, %c0_i32_0 : i32
    scf.if %2 {
      %cst_16 = arith.constant 0.000000e+00 : f32
      %25 = vector.broadcast %cst_16 : f32 to vector<8x1xf32>
      %c0_17 = arith.constant 0 : index
      %c0_18 = arith.constant 0 : index
      %26 = vector.load %arg5[%c0_17, %c0_18] : memref<8x1xf32, #tpu.memory_space<vmem>>, vector<8x1xf32>
      tpu.vector_store %arg5[%c0_17, %c0_18], %25 {strides = array<i32>} : memref<8x1xf32, #tpu.memory_space<vmem>>, vector<8x1xf32>,
      %cst_19 = arith.constant 0.000000e+00 : f32
      %27 = vector.broadcast %cst_19 : f32 to vector<8x1xf32>
      %c0_20 = arith.constant 0 : index
      %c0_21 = arith.constant 0 : index
      %28 = vector.load %arg6[%c0_20, %c0_21] : memref<8x1xf32, #tpu.memory_space<vmem>>, vector<8x1xf32>
      tpu.vector_store %arg6[%c0_20, %c0_21], %27 {strides = array<i32>} : memref<8x1xf32, #tpu.memory_space<vmem>>, vector<8x1xf32>,
    } else {
    }
    %c0 = arith.constant 0 : index
    %c0_1 = arith.constant 0 : index
    %3 = vector.load %arg2[%c0, %c0_1] : memref<8x256xf32, #tpu.memory_space<vmem>>, vector<8x256xf32>
    %4 = arith.negf %3 : vector<8x256xf32>
    %5 = math.exp %4 : vector<8x256xf32>
    %cst = arith.constant 1.000000e+00 : f32
    %6 = vector.broadcast %cst : f32 to vector<8x256xf32>
    %7 = arith.addf %6, %5 : vector<8x256xf32>
    %8 = arith.divf %6, %7 : vector<8x256xf32>
    %c0_2 = arith.constant 0 : index
    %c0_3 = arith.constant 0 : index
    %9 = vector.load %arg3[%c0_2, %c0_3] : memref<8x256xf32, #tpu.memory_space<vmem>>, vector<8x256xf32>
    %c0_4 = arith.constant 0 : index
    %c0_5 = arith.constant 0 : index
    %10 = vector.load %arg5[%c0_4, %c0_5] : memref<8x1xf32, #tpu.memory_space<vmem>>, vector<8x1xf32>
    %11 = arith.mulf %8, %9 : vector<8x256xf32>
    %cst_6 = arith.constant dense<0.000000e+00> : vector<8xf32>
    %12 = vector.multi_reduction <add>, %11, %cst_6 [1] : vector<8x256xf32> to vector<8xf32>
    %13 = vector.shape_cast %12 : vector<8xf32> to vector<8x1xf32>
    %14 = arith.addf %10, %13 : vector<8x1xf32>
    %c0_7 = arith.constant 0 : index
    %c0_8 = arith.constant 0 : index
    %15 = vector.load %arg5[%c0_7, %c0_8] : memref<8x1xf32, #tpu.memory_space<vmem>>, vector<8x1xf32>
    tpu.vector_store %arg5[%c0_7, %c0_8], %14 {strides = array<i32>} : memref<8x1xf32, #tpu.memory_space<vmem>>, vector<8x1xf32>,
    %c0_9 = arith.constant 0 : index
    %c0_10 = arith.constant 0 : index
    %16 = vector.load %arg6[%c0_9, %c0_10] : memref<8x1xf32, #tpu.memory_space<vmem>>, vector<8x1xf32>
    %17 = arith.addf %8, %9 : vector<8x256xf32>
    %cst_11 = arith.constant dense<0.000000e+00> : vector<8xf32>
    %18 = vector.multi_reduction <add>, %17, %cst_11 [1] : vector<8x256xf32> to vector<8xf32>
    %19 = vector.shape_cast %18 : vector<8xf32> to vector<8x1xf32>
    %20 = arith.addf %16, %19 : vector<8x1xf32>
    %c0_12 = arith.constant 0 : index
    %c0_13 = arith.constant 0 : index
    %21 = vector.load %arg6[%c0_12, %c0_13] : memref<8x1xf32, #tpu.memory_space<vmem>>, vector<8x1xf32>
    tpu.vector_store %arg6[%c0_12, %c0_13], %20 {strides = array<i32>} : memref<8x1xf32, #tpu.memory_space<vmem>>, vector<8x1xf32>,
    %c0_i32_14 = arith.constant 0 : i32
    %22 = arith.cmpi eq, %arg1, %c0_i32_14 : i32
    %23 = arith.extui %22 : i1 to i32
    %c0_i32_15 = arith.constant 0 : i32
    %24 = arith.cmpi ne, %23, %c0_i32_15 : i32
    scf.if %24 {
      %c0_16 = arith.constant 0 : index
      %c0_17 = arith.constant 0 : index
      %25 = vector.load %arg5[%c0_16, %c0_17] : memref<8x1xf32, #tpu.memory_space<vmem>>, vector<8x1xf32>
      %c0_18 = arith.constant 0 : index
      %c0_19 = arith.constant 0 : index
      %26 = vector.load %arg6[%c0_18, %c0_19] : memref<8x1xf32, #tpu.memory_space<vmem>>, vector<8x1xf32>
      %27 = arith.subf %26, %25 : vector<8x1xf32>
      %28 = arith.divf %25, %27 : vector<8x1xf32>
      %cst_20 = arith.constant 1.000000e+00 : f32
      %29 = vector.broadcast %cst_20 : f32 to vector<8x1xf32>
      %30 = arith.subf %29, %28 : vector<8x1xf32>
      %c0_21 = arith.constant 0 : index
      %c0_22 = arith.constant 0 : index
      %31 = vector.load %arg4[%c0_21, %c0_22] : memref<8x1xf32, #tpu.memory_space<vmem>>, vector<8x1xf32>
      tpu.vector_store %arg4[%c0_21, %c0_22], %30 {strides = array<i32>} : memref<8x1xf32, #tpu.memory_space<vmem>>, vector<8x1xf32>,
    } else {
    }
    return
  }
  func.func @transform_0(%arg0: i32, %arg1: i32) -> (i32, i32) {
    %c0_i32 = arith.constant 0 : i32
    return %arg0, %arg1 : i32, i32
  }
  func.func @transform_1(%arg0: i32, %arg1: i32) -> (i32, i32) {
    %c0_i32 = arith.constant 0 : i32
    return %arg0, %arg1 : i32, i32
  }
  func.func @transform_2(%arg0: i32, %arg1: i32) -> (i32, i32) {
    %c0_i32 = arith.constant 0 : i32
    %c0_i32_0 = arith.constant 0 : i32
    return %arg0, %c0_i32 : i32, i32
  }
}

</mosaic_0001>

<llo_original>
// kernel: tpu_custom_call.1
$region0: #{tpu_custom_call.1}
  #allocation0 [shape = 'u32[]', space=smem, size = 0x4, offset = 0x4, fixed_abs, tag = 'smem constant byte address 0x4 - core index']
  #allocation1 [shape = 'u32[144,128]{1,0:T(1,128)}', space=vmem, size = 0x12000, scoped, tag = 'internal scratch']
  #allocation2 [shape = 'f32[8,1]{1,0:T(8,128)}', space=vmem, size = 0x1000, scoped, tag = 'scratch operand']
  #allocation3 [shape = 'f32[8,1]{1,0:T(8,128)}', space=vmem, size = 0x1000, scoped, tag = 'scratch operand']
  %s0 = inlined_call_operand.hbm [shape: f32[8,256], index: 0, kind: input, shape index: {}]
  %s1 = inlined_call_operand.hbm [shape: f32[8,256], index: 1, kind: input, shape index: {}]
  %s2 = inlined_call_operand.vmem [shape: f32[8,1], index: 2, kind: output, shape index: {}]
  %s3 = sld [smem:[#allocation0]]
  $region34: #{tpu_custom_call.1} parent=0
    _
  %s5 = ssub.s32 1, %s3
  %s6 = scalar_select 0, %s5, %s3
  $region1: #{tpu_custom_call.1} parent=0
    #allocation4 [shape = 'u8[8192]{0}', space=vmem, size = 0x2000, scoped, tag = 'input window, operand 0, single buffered']
    #allocation5 [shape = 's32[1]{0}', space=sflag, size = 0x4, scoped, tag = 'scoped memory for tpu_custom_call.1']
    #allocation6 [shape = 'u8[8192]{0}', space=vmem, size = 0x2000, scoped, tag = 'input window, operand 1, single buffered']
    #allocation7 [shape = 's32[1]{0}', space=sflag, size = 0x4, scoped, tag = 'scoped memory for tpu_custom_call.1']
    %7 = vsyncpa [#allocation5], 0
    %8 = vsyncpa [#allocation7], 0
    // Predicated region
    $region2: #{tpu_custom_call.1} parent=1 // pred_check
      _
    $region3: #{tpu_custom_call.1} parent=1 // pred_check_branch
      %10 = sbr.rel (0) target = $region5
    $region4: #{tpu_custom_call.1} parent=1 // pred_region
      %s12 = ssub.s32 256, 256
      %13 = vsyncadd [#allocation5], %s12
      %s15 = sshll.u32 [#allocation4], 4
      %s16 = int_to_ptr.vmem [resolvable:$true] %s15
      %18 = dma.hbm_to_vmem [thread:$0]  %s0, 256, %s16, [#allocation5]
    $region5: #{tpu_custom_call.1} parent=1 // pred_fallthru
      _
    // Predicated region
    $region6: #{tpu_custom_call.1} parent=1 // pred_check
      _
    $region7: #{tpu_custom_call.1} parent=1 // pred_check_branch
      %20 = sbr.rel (0) target = $region9
    $region8: #{tpu_custom_call.1} parent=1 // pred_region
      %s22 = ssub.s32 256, 256
      %23 = vsyncadd [#allocation7], %s22
      %s25 = sshll.u32 [#allocation6], 4
      %s26 = int_to_ptr.vmem [resolvable:$true] %s25
      %28 = dma.hbm_to_vmem [thread:$0]  %s1, 256, %s26, [#allocation7]
    $region9: #{tpu_custom_call.1} parent=1 // pred_fallthru
      _
    // Predicated region
    $region10: #{tpu_custom_call.1} parent=1 // pred_check
      _
    $region11: #{tpu_custom_call.1} parent=1 // pred_check_branch
      %30 = sbr.rel (0) target = $region13
    $region12: #{tpu_custom_call.1} parent=1 // pred_region
      %31 = dma.done [#allocation5], 256
    $region13: #{tpu_custom_call.1} parent=1 // pred_fallthru
      _
    // Predicated region
    $region14: #{tpu_custom_call.1} parent=1 // pred_check
      _
    $region15: #{tpu_custom_call.1} parent=1 // pred_check_branch
      %33 = sbr.rel (0) target = $region17
    $region16: #{tpu_custom_call.1} parent=1 // pred_region
      %34 = dma.done [#allocation7], 256
    $region17: #{tpu_custom_call.1} parent=1 // pred_fallthru
      _
    %p35 = scmp.eq.s32.totalorder 0, 0
    // Predicated region
    $region18: #{tpu_custom_call.1} parent=1 // pred_check
      %p36 = pneg %p35
    $region19: #{tpu_custom_call.1} parent=1 // pred_check_branch
      %38 = sbr.rel (%p36) target = $region21
    $region20: #{tpu_custom_call.1} parent=1 // pred_region
      %vm39 = vcmask 7168
      %40 = vst.msk [vmem:[#allocation2] sm:$0xff] %vm39, 0.0
      %41 = vst.msk [vmem:[#allocation3] sm:$0xff] %vm39, 0.0
    $region21: #{tpu_custom_call.1} parent=1 // pred_fallthru
      _
    %v42 = vld [vmem:[#allocation4] sm:$0xff]
    %v43 = vld [vmem:[#allocation4 + $0x8] sm:$0xff]
    %v44 = vxor.u32 %v42, 2147483648
    %v45 = vxor.u32 %v43, 2147483648
    %v46 = vmul.f32 %v44, 1.442695
    %v47 = vpow.pop %v46
    %v48 = vmul.f32 %v45, 1.442695
    %v49 = vpow.pop %v48
    %v50 = vadd.f32 %v47, 1.0
    %v51 = vadd.f32 %v49, 1.0
    %v52 = vrcp.pop %v50
    %v53 = vmul.f32 1.0, %v52
    %v54 = vrcp.pop %v51
    %v55 = vmul.f32 1.0, %v54
    %v56 = vld [vmem:[#allocation6] sm:$0xff]
    %v57 = vld [vmem:[#allocation6 + $0x8] sm:$0xff]
    %v58 = vld [vmem:[#allocation2] sm:$0xff]
    %v59 = vmul.f32 %v53, %v56
    %v60 = vmul.f32 %v55, %v57
    %v61 = vadd.f32 %v59, %v60
    %62 = vadd.xlane.f32.xlu0 %v61
    %v63 = vpop.xlane.xlu0 %62
    %v64 = vadd.f32 %v58, %v63
    %vm65 = vcmask 7168
    %66 = vst.msk [vmem:[#allocation2] sm:$0xff] %vm65, %v64
    %v67 = vld [vmem:[#allocation3] sm:$0xff]
    %v68 = vadd.f32 %v53, %v56
    %v69 = vadd.f32 %v55, %v57
    %v70 = vadd.f32 %v68, %v69
    %71 = vadd.xlane.f32.xlu0 %v70
    %v72 = vpop.xlane.xlu0 %71
    %v73 = vadd.f32 %v67, %v72
    %74 = vst.msk [vmem:[#allocation3] sm:$0xff] %vm65, %v73
    // Predicated region
    $region22: #{tpu_custom_call.1} parent=1 // pred_check
      %p75 = pneg %p35
    $region23: #{tpu_custom_call.1} parent=1 // pred_check_branch
      %77 = sbr.rel (%p75) target = $region25
    $region24: #{tpu_custom_call.1} parent=1 // pred_region
      %v78 = vld [vmem:[#allocation2] sm:$0xff]
      %v79 = vld [vmem:[#allocation3] sm:$0xff]
      %v80 = vsub.f32 %v79, %v78
      %v81 = vrcp.pop %v80
      %v82 = vmul.f32 %v78, %v81
      %v83 = vsub.f32 1.0, %v82
      %84 = vst.msk [vmem:[%s2] sm:$0xff] %vm65, %v83
    $region25: #{tpu_custom_call.1} parent=1 // pred_fallthru
      _
    // Predicated region
    $region26: #{tpu_custom_call.1} parent=1 // pred_check
      _
    $region27: #{tpu_custom_call.1} parent=1 // pred_check_branch
      %86 = sbr.rel (0) target = $region29
    $region28: #{tpu_custom_call.1} parent=1 // pred_region
      _
    $region29: #{tpu_custom_call.1} parent=1 // pred_fallthru
      _
    // Predicated region
    $region30: #{tpu_custom_call.1} parent=1 // pred_check
      _
    $region31: #{tpu_custom_call.1} parent=1 // pred_check_branch
      %88 = sbr.rel (0) target = $region33
    $region32: #{tpu_custom_call.1} parent=1 // pred_region
      _
    $region33: #{tpu_custom_call.1} parent=1 // pred_fallthru
      _
    %89 = vsyncpa [#allocation5], 1
    %90 = vsyncpa [#allocation7], 1

</llo_original>
